<compile_context>
chip_gen: v7x
topology: tpu7x:2x2x1
jax: 0.10.0
libtpu: 0.0.40
codegen_flags: <defaults>
</compile_context>

<pallas_src>
import functools
import math

import numpy as np

import jax
import jax.numpy as jnp
from jax.experimental import pallas as pl
from jax.experimental.pallas import tpu as pltpu


def _round_up(v, m):
    return ((v + m - 1) // m) * m


_VMEM_BUDGET = 48 * 1024 * 1024  # per-TensorCore working-set budget (v7x: 64 MiB/TC)


def _head_kernel(*refs, num_layers: int):
    """Fused MLP head.

    refs = (x_ref, w1_ref, b1_ref, ..., wn_ref, bn_ref, o_ref)
      x_ref: (tile_m, K)    wi_ref: (Ki, Ni)   bi_ref: (1, Ni) f32
      o_ref: (tile_m, N_last_pad)  (padded to 128 -> lane-dense store)
    Weights arrive already in their compute dtype (pre-cast in the wrapper);
    only the per-layer activation cast remains. Matmuls accumulate in f32 on
    the MXU; bias add + ReLU run in f32 on the VPU. Intermediates stay in
    VMEM/vregs.
    """
    x_ref = refs[0]
    o_ref = refs[-1]

    h = x_ref[...]
    for i in range(num_layers):
        w_ref = refs[1 + 2 * i]
        b_ref = refs[2 + 2 * i]
        if h.dtype != w_ref.dtype:          # activation cast only (bf16 path)
            h = h.astype(w_ref.dtype)
        h = jnp.dot(h, w_ref[...], preferred_element_type=jnp.float32)
        h = h + b_ref[...]                  # (1, N) f32 broadcast over rows
        if i < num_layers - 1:
            h = jnp.maximum(h, 0.0)         # ReLU (not after last layer)
    o_ref[...] = h.astype(o_ref.dtype)


def prepare_head_params(params, *, use_bf16=False):
    """One-time (out-of-hot-path) padding + casting of Head parameters.

    params: list of (w_t, b) with w_t shaped (in_dim, out_dim), b shaped (out_dim,)
    Only the LAST layer's output dim is zero-padded to a multiple of 128 (for
    lane-dense output stores). Weights are stored in the MXU compute dtype
    (bf16 recommended on v5e/v6e/v7x); biases stay f32 (epilogue is f32 and
    their bytes are negligible).
    Returns (layers, out_dim).
    """
    wdtype = jnp.bfloat16 if use_bf16 else jnp.float32
    num = len(params)
    layers = []
    for i, (w_t, b) in enumerate(params):
        kin, kout = w_t.shape
        kout_pad = _round_up(kout, 128) if i == num - 1 else kout
        if kout_pad != kout:
            # Zero padding is exact: padded output lanes have zero weight
            # columns and zero bias (and no ReLU follows the last layer).
            w_p = jnp.zeros((kin, kout_pad), wdtype).at[:, :kout].set(
                w_t.astype(wdtype))
            b_p = jnp.zeros((1, kout_pad), jnp.float32).at[0, :kout].set(
                b.astype(jnp.float32))
        else:
            w_p = w_t.astype(wdtype)
            b_p = b.astype(jnp.float32).reshape(1, kout)
        layers.append((w_p, b_p))
    return tuple(layers), params[-1][0].shape[1]


def _choose_tile_and_vmem(M, K, out_pad, layers, x_bytes, out_bytes):
    """Largest batch tile that fits the per-TC VMEM budget + vmem limit."""
    # Weights/biases are single-buffered (Buffered(1)) and VMEM-resident.
    weight_bytes = sum(w.size * w.dtype.itemsize + b.size * b.dtype.itemsize
                       for (w, b) in layers)
    max_d = max([K, out_pad] + [w.shape[1] for (w, _) in layers])

    def usage(tm):
        io = 2 * tm * K * x_bytes + 2 * tm * out_pad * out_bytes  # dbl-buffered tiles
        act = 2 * tm * max_d * 4                                  # live f32 activations
        return weight_bytes + io + act

    cap = 8
    for cand in (512, 256, 128, 64, 32, 16, 8):
        if usage(cand) <= _VMEM_BUDGET:
            cap = cand
            break
    m8 = _round_up(max(M, 1), 8)
    tile_m = m8 if m8 <= cap else cap
    vmem_limit = min(max(int(usage(tile_m) * 2), 32 * 1024 * 1024),
                     64 * 1024 * 1024)
    return tile_m, vmem_limit


def head_forward(x, prepared, *, out_dtype=None, tile_m=None):
    """Forward pass of Head as ONE fused Pallas kernel.

    x:        (M, input_dim)
    prepared: output of prepare_head_params(params, use_bf16=...)
    """
    layers, out_dim = prepared
    M, K = x.shape
    num_layers = len(layers)
    compute_dtype = layers[0][0].dtype
    out_pad = layers[-1][0].shape[1]
    odt = out_dtype if out_dtype is not None else x.dtype

    auto_tile, vmem_limit = _choose_tile_and_vmem(
        M, K, out_pad, layers,
        np.dtype(compute_dtype).itemsize, np.dtype(odt).itemsize)
    if tile_m is None:
        tile_m = auto_tile
    else:
        tile_m = _round_up(min(tile_m, _round_up(M, 8)), 8)
    M_pad = _round_up(M, tile_m)

    # Pad / cast x only when actually required (avoids wrapper HBM traffic).
    x_in = x if x.dtype == compute_dtype else x.astype(compute_dtype)
    if M_pad != M:
        x_p = jnp.zeros((M_pad, K), compute_dtype).at[:M, :].set(x_in)
    else:
        x_p = x_in

    flat_wb = []
    for w_p, b_p in layers:
        flat_wb += [w_p, b_p]

    kernel = functools.partial(_head_kernel, num_layers=num_layers)

    def _run(single_buffer_weights):
        wb_kwargs = ({"pipeline_mode": pl.Buffered(1)}
                     if single_buffer_weights else {})
        # x / out tiled over the batch; weights/biases are full-array blocks
        # whose index_map ignores the batch axis -> DMA'd once, VMEM-resident.
        in_specs = [pl.BlockSpec((tile_m, K), lambda i: (i, 0))]
        for w_p, b_p in layers:
            in_specs.append(pl.BlockSpec(w_p.shape, lambda i: (0, 0), **wb_kwargs))
            in_specs.append(pl.BlockSpec(b_p.shape, lambda i: (0, 0), **wb_kwargs))
        return pl.pallas_call(
            kernel,
            out_shape=jax.ShapeDtypeStruct((M_pad, out_pad), odt),
            grid=(M_pad // tile_m,),
            in_specs=in_specs,
            out_specs=pl.BlockSpec((tile_m, out_pad), lambda i: (i, 0)),
            compiler_params=pltpu.CompilerParams(
                dimension_semantics=("parallel",),
                vmem_limit_bytes=vmem_limit),
        )(x_p, *flat_wb)

    try:
        out_p = _run(True)        # weights/biases single-buffered
    except Exception:             # fallback: default double-buffering
        out_p = _run(False)

    # Padded batch rows contain bias-propagated garbage and padded output
    # lanes are exactly zero -> slice both off before any downstream use.
    return out_p[:M, :out_dim]


def init_head_params(key, input_dim, proj_dims, dtype=jnp.float32):
    """Deterministic init matching torch.nn.Linear default U[-1/sqrt(fan_in), +]."""
    if not isinstance(proj_dims, (list, tuple)):
        proj_dims = [proj_dims]
    params = []
    in_dim = input_dim
    for d in proj_dims:
        key, kw, kb = jax.random.split(key, 3)
        bound = 1.0 / math.sqrt(in_dim)
        w_t = jax.random.uniform(kw, (in_dim, d), dtype=dtype,
                                 minval=-bound, maxval=bound)
        b = jax.random.uniform(kb, (d,), dtype=dtype,
                               minval=-bound, maxval=bound)
        params.append((w_t, b))
        in_dim = d
    return params


def head_forward_ref(x, params):
    """Pure-JAX reference for correctness checking."""
    n = len(params)
    out = x
    for i, (w_t, b) in enumerate(params):
        out = out @ w_t + b
        if i < n - 1:
            out = jnp.maximum(out, 0.0)
    return out


if __name__ == "__main__":
    key = jax.random.PRNGKey(0)

    # Case 1: original small shapes (single batch tile, f32 exact path).
    k_x, k_p, key = jax.random.split(key, 3)
    batch, input_dim, proj_dims = 8, 32, [64, 32]
    x = jax.random.normal(k_x, (batch, input_dim), dtype=jnp.float32)
    params = init_head_params(k_p, input_dim, proj_dims)
    prep = prepare_head_params(params, use_bf16=False)

    out = jax.block_until_ready(head_forward(x, prep))
    ref = head_forward_ref(x, params)
    assert out.shape == (batch, proj_dims[-1]), out.shape
    assert jnp.allclose(out, ref, atol=1e-5, rtol=1e-5), "mismatch (case 1)"

    # Case 2: non-aligned batch/features; force a small tile_m to exercise the
    # multi-tile "parallel" batch grid and batch-row padding.
    k_x2, k_p2, key = jax.random.split(key, 3)
    batch2, input_dim2, proj_dims2 = 136, 48, [96, 40]
    x2 = jax.random.normal(k_x2, (batch2, input_dim2), dtype=jnp.float32)
    params2 = init_head_params(k_p2, input_dim2, proj_dims2)
    prep2 = prepare_head_params(params2, use_bf16=False)

    out2 = jax.block_until_ready(head_forward(x2, prep2, tile_m=64))
    ref2 = head_forward_ref(x2, params2)
    assert out2.shape == (batch2, proj_dims2[-1]), out2.shape
    assert jnp.allclose(out2, ref2, atol=1e-5, rtol=1e-5), "mismatch (case 2)"

    # Case 3: bf16 MXU operands (recommended fast path on v5e/v6e/v7x),
    # f32 accumulation + f32 epilogue, bf16 output writeback.
    prep2_bf16 = prepare_head_params(params2, use_bf16=True)
    out_bf16 = jax.block_until_ready(
        head_forward(x2, prep2_bf16, out_dtype=jnp.bfloat16))
    assert out_bf16.dtype == jnp.bfloat16
    assert jnp.allclose(out_bf16.astype(jnp.float32), ref2,
                        atol=5e-2, rtol=5e-2), "mismatch (bf16)"

    print("KERNEL_OK")
</pallas_src>

<mosaic_0001>
module attributes {stable_mosaic.version = 11 : i64} {
  func.func @_head_kernel(%arg0: i32, %arg1: memref<8x32xf32, #tpu.memory_space<vmem>>, %arg2: memref<32x64xf32, #tpu.memory_space<vmem>>, %arg3: memref<1x64xf32, #tpu.memory_space<vmem>>, %arg4: memref<64x128xf32, #tpu.memory_space<vmem>>, %arg5: memref<1x128xf32, #tpu.memory_space<vmem>>, %arg6: memref<8x128xf32, #tpu.memory_space<vmem>>) attributes {dimension_semantics = [#tpu.dimension_semantics<parallel>], iteration_bounds = array<i64: 1>, scalar_prefetch = 0 : i64, scratch_operands = 0 : i64, tpu.core_type = #tpu.core_type<tc>, window_params = [{transform_indices = @transform_0, window_bounds = array<i64: 8, 32>}, {pipeline_mode = #tpu.pipeline_mode<synchronous>, transform_indices = @transform_1, window_bounds = array<i64: 32, 64>}, {pipeline_mode = #tpu.pipeline_mode<synchronous>, transform_indices = @transform_2, window_bounds = array<i64: 1, 64>}, {pipeline_mode = #tpu.pipeline_mode<synchronous>, transform_indices = @transform_3, window_bounds = array<i64: 64, 128>}, {pipeline_mode = #tpu.pipeline_mode<synchronous>, transform_indices = @transform_4, window_bounds = array<i64: 1, 128>}, {transform_indices = @transform_5, window_bounds = array<i64: 8, 128>}]} {
    %c0 = arith.constant 0 : index
    %c0_0 = arith.constant 0 : index
    %0 = vector.load %arg1[%c0, %c0_0] : memref<8x32xf32, #tpu.memory_space<vmem>>, vector<8x32xf32>
    %c0_1 = arith.constant 0 : index
    %c0_2 = arith.constant 0 : index
    %1 = vector.load %arg2[%c0_1, %c0_2] : memref<32x64xf32, #tpu.memory_space<vmem>>, vector<32x64xf32>
    %cst = arith.constant dense<0.000000e+00> : vector<8x64xf32>
    %2 = tpu.matmul %0, %1, %cst {dimension_numbers = #tpu.dot_dimension_numbers<[1], [0], [0], [1], [0, 0, 1, 1], [], []>} : vector<8x32xf32>, vector<32x64xf32>, vector<8x64xf32> -> vector<8x64xf32>
    %c0_3 = arith.constant 0 : index
    %c0_4 = arith.constant 0 : index
    %3 = vector.load %arg3[%c0_3, %c0_4] : memref<1x64xf32, #tpu.memory_space<vmem>>, vector<1x64xf32>
    %4 = vector.broadcast %3 : vector<1x64xf32> to vector<8x64xf32>
    %5 = arith.addf %2, %4 : vector<8x64xf32>
    %cst_5 = arith.constant 0.000000e+00 : f32
    %6 = vector.broadcast %cst_5 : f32 to vector<8x64xf32>
    %7 = arith.maximumf %5, %6 : vector<8x64xf32>
    %c0_6 = arith.constant 0 : index
    %c0_7 = arith.constant 0 : index
    %8 = vector.load %arg4[%c0_6, %c0_7] : memref<64x128xf32, #tpu.memory_space<vmem>>, vector<64x128xf32>
    %cst_8 = arith.constant dense<0.000000e+00> : vector<8x128xf32>
    %9 = tpu.matmul %7, %8, %cst_8 {dimension_numbers = #tpu.dot_dimension_numbers<[1], [0], [0], [1], [0, 0, 1, 1], [], []>} : vector<8x64xf32>, vector<64x128xf32>, vector<8x128xf32> -> vector<8x128xf32>
    %c0_9 = arith.constant 0 : index
    %c0_10 = arith.constant 0 : index
    %10 = vector.load %arg5[%c0_9, %c0_10] : memref<1x128xf32, #tpu.memory_space<vmem>>, vector<1x128xf32>
    %11 = vector.broadcast %10 : vector<1x128xf32> to vector<8x128xf32>
    %12 = arith.addf %9, %11 : vector<8x128xf32>
    %c0_11 = arith.constant 0 : index
    %c0_12 = arith.constant 0 : index
    %13 = vector.load %arg6[%c0_11, %c0_12] : memref<8x128xf32, #tpu.memory_space<vmem>>, vector<8x128xf32>
    tpu.vector_store %arg6[%c0_11, %c0_12], %12 {strides = array<i32>} : memref<8x128xf32, #tpu.memory_space<vmem>>, vector<8x128xf32>,
    return
  }
  func.func @transform_0(%arg0: i32) -> (i32, i32) {
    %c0_i32 = arith.constant 0 : i32
    %c0_i32_0 = arith.constant 0 : i32
    return %arg0, %c0_i32 : i32, i32
  }
  func.func @transform_1(%arg0: i32) -> (i32, i32) {
    %c0_i32 = arith.constant 0 : i32
    %c0_i32_0 = arith.constant 0 : i32
    %c0_i32_1 = arith.constant 0 : i32
    return %c0_i32, %c0_i32_0 : i32, i32
  }
  func.func @transform_2(%arg0: i32) -> (i32, i32) {
    %c0_i32 = arith.constant 0 : i32
    %c0_i32_0 = arith.constant 0 : i32
    %c0_i32_1 = arith.constant 0 : i32
    return %c0_i32, %c0_i32_0 : i32, i32
  }
  func.func @transform_3(%arg0: i32) -> (i32, i32) {
    %c0_i32 = arith.constant 0 : i32
    %c0_i32_0 = arith.constant 0 : i32
    %c0_i32_1 = arith.constant 0 : i32
    return %c0_i32, %c0_i32_0 : i32, i32
  }
  func.func @transform_4(%arg0: i32) -> (i32, i32) {
    %c0_i32 = arith.constant 0 : i32
    %c0_i32_0 = arith.constant 0 : i32
    %c0_i32_1 = arith.constant 0 : i32
    return %c0_i32, %c0_i32_0 : i32, i32
  }
  func.func @transform_5(%arg0: i32) -> (i32, i32) {
    %c0_i32 = arith.constant 0 : i32
    %c0_i32_0 = arith.constant 0 : i32
    return %arg0, %c0_i32 : i32, i32
  }
}

module attributes {stable_mosaic.version = 11 : i64} {
  func.func @_head_kernel(%arg0: i32, %arg1: memref<8x32xf32, #tpu.memory_space<vmem>>, %arg2: memref<32x64xf32, #tpu.memory_space<vmem>>, %arg3: memref<1x64xf32, #tpu.memory_space<vmem>>, %arg4: memref<64x128xf32, #tpu.memory_space<vmem>>, %arg5: memref<1x128xf32, #tpu.memory_space<vmem>>, %arg6: memref<8x128xf32, #tpu.memory_space<vmem>>) attributes {dimension_semantics = [#tpu.dimension_semantics<parallel>], iteration_bounds = array<i64: 1>, scalar_prefetch = 0 : i64, scratch_operands = 0 : i64, tpu.core_type = #tpu.core_type<tc>, window_params = [{transform_indices = @transform_0, window_bounds = array<i64: 8, 32>}, {pipeline_mode = #tpu.pipeline_mode<synchronous>, transform_indices = @transform_1, window_bounds = array<i64: 32, 64>}, {pipeline_mode = #tpu.pipeline_mode<synchronous>, transform_indices = @transform_2, window_bounds = array<i64: 1, 64>}, {pipeline_mode = #tpu.pipeline_mode<synchronous>, transform_indices = @transform_3, window_bounds = array<i64: 64, 128>}, {pipeline_mode = #tpu.pipeline_mode<synchronous>, transform_indices = @transform_4, window_bounds = array<i64: 1, 128>}, {transform_indices = @transform_5, window_bounds = array<i64: 8, 128>}]} {
    %c0 = arith.constant 0 : index
    %c0_0 = arith.constant 0 : index
    %0 = vector.load %arg1[%c0, %c0_0] : memref<8x32xf32, #tpu.memory_space<vmem>>, vector<8x32xf32>
    %c0_1 = arith.constant 0 : index
    %c0_2 = arith.constant 0 : index
    %1 = vector.load %arg2[%c0_1, %c0_2] : memref<32x64xf32, #tpu.memory_space<vmem>>, vector<32x64xf32>
    %cst = arith.constant dense<0.000000e+00> : vector<8x64xf32>
    %2 = tpu.matmul %0, %1, %cst {dimension_numbers = #tpu.dot_dimension_numbers<[1], [0], [0], [1], [0, 0, 1, 1], [], []>} : vector<8x32xf32>, vector<32x64xf32>, vector<8x64xf32> -> vector<8x64xf32>
    %c0_3 = arith.constant 0 : index
    %c0_4 = arith.constant 0 : index
    %3 = vector.load %arg3[%c0_3, %c0_4] : memref<1x64xf32, #tpu.memory_space<vmem>>, vector<1x64xf32>
    %4 = vector.broadcast %3 : vector<1x64xf32> to vector<8x64xf32>
    %5 = arith.addf %2, %4 : vector<8x64xf32>
    %cst_5 = arith.constant 0.000000e+00 : f32
    %6 = vector.broadcast %cst_5 : f32 to vector<8x64xf32>
    %7 = arith.maximumf %5, %6 : vector<8x64xf32>
    %c0_6 = arith.constant 0 : index
    %c0_7 = arith.constant 0 : index
    %8 = vector.load %arg4[%c0_6, %c0_7] : memref<64x128xf32, #tpu.memory_space<vmem>>, vector<64x128xf32>
    %cst_8 = arith.constant dense<0.000000e+00> : vector<8x128xf32>
    %9 = tpu.matmul %7, %8, %cst_8 {dimension_numbers = #tpu.dot_dimension_numbers<[1], [0], [0], [1], [0, 0, 1, 1], [], []>} : vector<8x64xf32>, vector<64x128xf32>, vector<8x128xf32> -> vector<8x128xf32>
    %c0_9 = arith.constant 0 : index
    %c0_10 = arith.constant 0 : index
    %10 = vector.load %arg5[%c0_9, %c0_10] : memref<1x128xf32, #tpu.memory_space<vmem>>, vector<1x128xf32>
    %11 = vector.broadcast %10 : vector<1x128xf32> to vector<8x128xf32>
    %12 = arith.addf %9, %11 : vector<8x128xf32>
    %c0_11 = arith.constant 0 : index
    %c0_12 = arith.constant 0 : index
    %13 = vector.load %arg6[%c0_11, %c0_12] : memref<8x128xf32, #tpu.memory_space<vmem>>, vector<8x128xf32>
    tpu.vector_store %arg6[%c0_11, %c0_12], %12 {strides = array<i32>} : memref<8x128xf32, #tpu.memory_space<vmem>>, vector<8x128xf32>,
    return
  }
  func.func @transform_0(%arg0: i32) -> (i32, i32) {
    %c0_i32 = arith.constant 0 : i32
    %c0_i32_0 = arith.constant 0 : i32
    return %arg0, %c0_i32 : i32, i32
  }
  func.func @transform_1(%arg0: i32) -> (i32, i32) {
    %c0_i32 = arith.constant 0 : i32
    %c0_i32_0 = arith.constant 0 : i32
    %c0_i32_1 = arith.constant 0 : i32
    return %c0_i32, %c0_i32_0 : i32, i32
  }
  func.func @transform_2(%arg0: i32) -> (i32, i32) {
    %c0_i32 = arith.constant 0 : i32
    %c0_i32_0 = arith.constant 0 : i32
    %c0_i32_1 = arith.constant 0 : i32
    return %c0_i32, %c0_i32_0 : i32, i32
  }
  func.func @transform_3(%arg0: i32) -> (i32, i32) {
    %c0_i32 = arith.constant 0 : i32
    %c0_i32_0 = arith.constant 0 : i32
    %c0_i32_1 = arith.constant 0 : i32
    return %c0_i32, %c0_i32_0 : i32, i32
  }
  func.func @transform_4(%arg0: i32) -> (i32, i32) {
    %c0_i32 = arith.constant 0 : i32
    %c0_i32_0 = arith.constant 0 : i32
    %c0_i32_1 = arith.constant 0 : i32
    return %c0_i32, %c0_i32_0 : i32, i32
  }
  func.func @transform_5(%arg0: i32) -> (i32, i32) {
    %c0_i32 = arith.constant 0 : i32
    %c0_i32_0 = arith.constant 0 : i32
    return %arg0, %c0_i32 : i32, i32
  }
}

</mosaic_0001>

<llo_original>
// kernel: tpu_custom_call.1
$region0: #{tpu_custom_call.1}
  #allocation0 [shape = 'u32[]', space=smem, size = 0x4, offset = 0x4, fixed_abs, tag = 'smem constant byte address 0x4 - core index']
  #allocation1 [shape = 'u32[144,128]{1,0:T(1,128)}', space=vmem, size = 0x12000, scoped, tag = 'internal scratch']
  %s0 = inlined_call_operand.hbm [shape: f32[8,32], index: 0, kind: input, shape index: {}]
  %s1 = inlined_call_operand.hbm [shape: f32[32,64], index: 1, kind: input, shape index: {}]
  %s2 = inlined_call_operand.vmem [shape: f32[1,64], index: 2, kind: input, shape index: {}]
  %s3 = inlined_call_operand.hbm [shape: f32[64,128], index: 3, kind: input, shape index: {}]
  %s4 = inlined_call_operand.vmem [shape: f32[1,128], index: 4, kind: input, shape index: {}]
  %s5 = inlined_call_operand.hbm [shape: f32[8,128], index: 5, kind: output, shape index: {}]
  %s6 = sld [smem:[#allocation0]]
  $region42: #{tpu_custom_call.1} parent=0
    _
  %s8 = ssub.s32 1, %s6
  %s9 = scalar_select 0, %s8, %s6
  $region1: #{tpu_custom_call.1} parent=0
    #allocation2 [shape = 'u8[4096]{0}', space=vmem, size = 0x1000, scoped, tag = 'input window, operand 0, single buffered']
    #allocation3 [shape = 's32[1]{0}', space=sflag, size = 0x4, scoped, tag = 'scoped memory for tpu_custom_call.1']
    #allocation4 [shape = 's32[1]{0}', space=sflag, size = 0x4, scoped, tag = 'scoped memory for tpu_custom_call.1']
    #allocation5 [shape = 'u8[16384]{0}', space=vmem, size = 0x4000, scoped, tag = 'input window, operand 1, single buffered']
    #allocation6 [shape = 's32[1]{0}', space=sflag, size = 0x4, scoped, tag = 'scoped memory for tpu_custom_call.1']
    #allocation7 [shape = 'u8[32768]{0}', space=vmem, size = 0x8000, scoped, tag = 'input window, operand 3, single buffered']
    #allocation8 [shape = 'u8[4096]{0}', space=vmem, size = 0x1000, scoped, tag = 'output window, operand 0, single buffered']
    %10 = vsyncpa [#allocation3], 0
    %11 = vsyncpa [#allocation6], 0
    %12 = vsyncpa [#allocation4], 0
    // Predicated region
    $region2: #{tpu_custom_call.1} parent=1 // pred_check
      _
    $region3: #{tpu_custom_call.1} parent=1 // pred_check_branch
      %14 = sbr.rel (0) target = $region5
    $region4: #{tpu_custom_call.1} parent=1 // pred_region
      %s16 = ssub.s32 128, 128
      %17 = vsyncadd [#allocation3], %s16
      %s19 = sshll.u32 [#allocation2], 4
      %s20 = int_to_ptr.vmem [resolvable:$true] %s19
      %22 = dma.hbm_to_vmem [thread:$0]  %s0, 128, %s20, [#allocation3]
    $region5: #{tpu_custom_call.1} parent=1 // pred_fallthru
      _
    // Predicated region
    $region6: #{tpu_custom_call.1} parent=1 // pred_check
      _
    $region7: #{tpu_custom_call.1} parent=1 // pred_check_branch
      %24 = sbr.rel (0) target = $region9
    $region8: #{tpu_custom_call.1} parent=1 // pred_region
      %s26 = ssub.s32 512, 512
      %27 = vsyncadd [#allocation6], %s26
      %s28 = sshll.u32 [#allocation5], 4
      %s29 = int_to_ptr.vmem [resolvable:$true] %s28
      %34 = dma.hbm_to_vmem [thread:$0]  %s1, 512, %s29, [#allocation6], 128, 128, 8
    $region9: #{tpu_custom_call.1} parent=1 // pred_fallthru
      _
    // Predicated region
    $region10: #{tpu_custom_call.1} parent=1 // pred_check
      _
    $region11: #{tpu_custom_call.1} parent=1 // pred_check_branch
      %36 = sbr.rel (0) target = $region13
    $region12: #{tpu_custom_call.1} parent=1 // pred_region
      _
    $region13: #{tpu_custom_call.1} parent=1 // pred_fallthru
      _
    // Predicated region
    $region14: #{tpu_custom_call.1} parent=1 // pred_check
      _
    $region15: #{tpu_custom_call.1} parent=1 // pred_check_branch
      %38 = sbr.rel (0) target = $region17
    $region16: #{tpu_custom_call.1} parent=1 // pred_region
      %s40 = ssub.s32 1024, 1024
      %41 = vsyncadd [#allocation6], %s40
      %s42 = sshll.u32 [#allocation7], 4
      %s43 = int_to_ptr.vmem [resolvable:$true] %s42
      %48 = dma.hbm_to_vmem [thread:$0]  %s3, 1024, %s43, [#allocation6], 128, 128, 8
    $region17: #{tpu_custom_call.1} parent=1 // pred_fallthru
      _
    // Predicated region
    $region18: #{tpu_custom_call.1} parent=1 // pred_check
      _
    $region19: #{tpu_custom_call.1} parent=1 // pred_check_branch
      %50 = sbr.rel (0) target = $region21
    $region20: #{tpu_custom_call.1} parent=1 // pred_region
      _
    $region21: #{tpu_custom_call.1} parent=1 // pred_fallthru
      _
    // Predicated region
    $region22: #{tpu_custom_call.1} parent=1 // pred_check
      _
    $region23: #{tpu_custom_call.1} parent=1 // pred_check_branch
      %52 = sbr.rel (0) target = $region25
    $region24: #{tpu_custom_call.1} parent=1 // pred_region
      %53 = dma.done [#allocation3], 128
    $region25: #{tpu_custom_call.1} parent=1 // pred_fallthru
      _
    // Predicated region
    $region26: #{tpu_custom_call.1} parent=1 // pred_check
      _
    $region27: #{tpu_custom_call.1} parent=1 // pred_check_branch
      %55 = sbr.rel (0) target = $region29
    $region28: #{tpu_custom_call.1} parent=1 // pred_region
      %56 = dma.done [#allocation6], 512
    $region29: #{tpu_custom_call.1} parent=1 // pred_fallthru
      _
    // Predicated region
    $region30: #{tpu_custom_call.1} parent=1 // pred_check
      _
    $region31: #{tpu_custom_call.1} parent=1 // pred_check_branch
      %58 = sbr.rel (0) target = $region33
    $region32: #{tpu_custom_call.1} parent=1 // pred_region
      %59 = dma.done [#allocation6], 1024
    $region33: #{tpu_custom_call.1} parent=1 // pred_fallthru
      _
    %v60 = vld [vmem:[#allocation2] sm:$0xff]
    %v61 = vld [vmem:[#allocation5] sm:$0xff]
    %v62 = vld [vmem:[#allocation5 + $0x8] sm:$0xff]
    %v63 = vld [vmem:[#allocation5 + $0x10] sm:$0xff]
    %v64 = vld [vmem:[#allocation5 + $0x18] sm:$0xff]
    %v65 = vld [vmem:[%s2] sm:$0x1]
    %v67 = vlaneseq
    %v68 = vshrl.u32 %v67, 7
    %v69 = vsub.s32 0, %v68
    %v70 = vrot.slane %v65, %v69
    %vm72 = vcmask 261120
    %v74 = vsel %vm72, %v60, 0
    %76 = vmatprep.subr.mxu0 0.0
    %77 = vmatpush1.msra.mxu0 %v61
    %78 = vmatprep.subr.mxu0 0.0
    %79 = vmatpush1.msra.mxu0 %v62
    %80 = vmatprep.subr.mxu0 0.0
    %81 = vmatpush1.msra.mxu0 %v63
    %82 = vmatprep.subr.mxu0 0.0
    %83 = vmatpush1.msra.mxu0 %v64
    %84 = vmatprep.subr.mxu0 0.0
    %85 = vmatpush1.msra.mxu0 0.0
    %86 = vmatprep.subr.mxu0 0.0
    %87 = vmatpush1.msra.mxu0 0.0
    %88 = vmatprep.subr.mxu0 0.0
    %89 = vmatpush1.msra.mxu0 0.0
    %90 = vmatprep.subr.mxu0 0.0
    %91 = vmatpush1.msra.mxu0 0.0
    %92 = vmatprep.subr.mxu0 0.0
    %93 = vmatpush1.msra.mxu0 0.0
    %94 = vmatprep.subr.mxu0 0.0
    %95 = vmatpush1.msra.mxu0 0.0
    %96 = vmatprep.subr.mxu0 0.0
    %97 = vmatpush1.msra.mxu0 0.0
    %98 = vmatprep.subr.mxu0 0.0
    %99 = vmatpush1.msra.mxu0 0.0
    %100 = vmatprep.subr.mxu0 0.0
    %101 = vmatpush1.msra.mxu0 0.0
    %102 = vmatprep.subr.mxu0 0.0
    %103 = vmatpush1.msra.mxu0 0.0
    %104 = vmatprep.subr.mxu0 0.0
    %105 = vmatpush1.msra.mxu0 0.0
    %106 = vmatprep.subr.mxu0 0.0
    %107 = vmatpush1.msra.mxu0 0.0
    %108 = vmatprep.subr.mxu0 0.0
    %109 = vmatpush1.msra.mxu0 0.0
    %110 = vmatprep.subr.mxu0 0.0
    %111 = vmatpush1.msra.mxu0 0.0
    %112 = vmatprep.subr.mxu0 0.0
    %113 = vmatpush1.msra.mxu0 0.0
    %114 = vmatprep.subr.mxu0 0.0
    %115 = vmatpush1.msra.mxu0 0.0
    %116 = vmatprep.subr.mxu0 0.0
    %117 = vmatpush1.msra.mxu0 0.0
    %118 = vmatprep.subr.mxu0 0.0
    %119 = vmatpush1.msra.mxu0 0.0
    %120 = vmatprep.subr.mxu0 0.0
    %121 = vmatpush1.msra.mxu0 0.0
    %122 = vmatprep.subr.mxu0 0.0
    %123 = vmatpush1.msra.mxu0 0.0
    %124 = vmatprep.subr.mxu0 0.0
    %125 = vmatpush1.msra.mxu0 0.0
    %126 = vmatprep.subr.mxu0 0.0
    %127 = vmatpush1.msra.mxu0 0.0
    %128 = vmatprep.subr.mxu0 0.0
    %129 = vmatpush1.msra.mxu0 0.0
    %130 = vmatprep.subr.mxu0 0.0
    %131 = vmatpush1.msra.mxu0 0.0
    %132 = vmatprep.subr.mxu0 0.0
    %133 = vmatpush1.msra.mxu0 0.0
    %134 = vmatprep.subr.mxu0 0.0
    %135 = vmatpush1.msra.mxu0 0.0
    %136 = vmatprep.subr.mxu0 0.0
    %137 = vmatpush1.msra.mxu0 0.0
    %138 = vmatprep.subr.mxu0 0.0
    %139 = vmatpush1.msra.mxu0 0.0
    %140 = vmatprep.mubr.f32.mxu0 0.0
    %141 = vmatmul.mubr.f32.gmra.mrb[0].mxu0 %v74
    %v142 = vpop.f32.mrb[0].mxu0
    %v143 = vadd.f32 %v70, %v142
    %v144 = vpop.f32.mrb[0].mxu0
    %145 = vdwg.mxu0
    %v146 = vmax.f32 %v143, 0.0
    %v147 = vld [vmem:[#allocation7] sm:$0xff]
    %v148 = vld [vmem:[#allocation7 + $0x8] sm:$0xff]
    %v149 = vld [vmem:[#allocation7 + $0x10] sm:$0xff]
    %v150 = vld [vmem:[#allocation7 + $0x18] sm:$0xff]
    %v151 = vld [vmem:[#allocation7 + $0x20] sm:$0xff]
    %v152 = vld [vmem:[#allocation7 + $0x28] sm:$0xff]
    %v153 = vld [vmem:[#allocation7 + $0x30] sm:$0xff]
    %v154 = vld [vmem:[#allocation7 + $0x38] sm:$0xff]
    %v155 = vld [vmem:[%s4] sm:$0x1]
    %v157 = vlaneseq
    %v158 = vshrl.u32 %v157, 7
    %v159 = vsub.s32 0, %v158
    %v160 = vrot.slane %v155, %v159
    %vm162 = vcmask 523264
    %v164 = vsel %vm162, %v146, 0
    %166 = vmatprep.subr.mxu0 0.0
    %167 = vmatpush1.msra.mxu0 %v147
    %168 = vmatprep.subr.mxu0 0.0
    %169 = vmatpush1.msra.mxu0 %v148
    %170 = vmatprep.subr.mxu0 0.0
    %171 = vmatpush1.msra.mxu0 %v149
    %172 = vmatprep.subr.mxu0 0.0
    %173 = vmatpush1.msra.mxu0 %v150
    %174 = vmatprep.subr.mxu0 0.0
    %175 = vmatpush1.msra.mxu0 %v151
    %176 = vmatprep.subr.mxu0 0.0
    %177 = vmatpush1.msra.mxu0 %v152
    %178 = vmatprep.subr.mxu0 0.0
    %179 = vmatpush1.msra.mxu0 %v153
    %180 = vmatprep.subr.mxu0 0.0
    %181 = vmatpush1.msra.mxu0 %v154
    %182 = vmatprep.subr.mxu0 0.0
    %183 = vmatpush1.msra.mxu0 0.0
    %184 = vmatprep.subr.mxu0 0.0
    %185 = vmatpush1.msra.mxu0 0.0
    %186 = vmatprep.subr.mxu0 0.0
    %187 = vmatpush1.msra.mxu0 0.0
    %188 = vmatprep.subr.mxu0 0.0
    %189 = vmatpush1.msra.mxu0 0.0
    %190 = vmatprep.subr.mxu0 0.0
    %191 = vmatpush1.msra.mxu0 0.0
    %192 = vmatprep.subr.mxu0 0.0
    %193 = vmatpush1.msra.mxu0 0.0
    %194 = vmatprep.subr.mxu0 0.0
    %195 = vmatpush1.msra.mxu0 0.0
    %196 = vmatprep.subr.mxu0 0.0
    %197 = vmatpush1.msra.mxu0 0.0
    %198 = vmatprep.subr.mxu0 0.0
    %199 = vmatpush1.msra.mxu0 0.0
    %200 = vmatprep.subr.mxu0 0.0
    %201 = vmatpush1.msra.mxu0 0.0
    %202 = vmatprep.subr.mxu0 0.0
    %203 = vmatpush1.msra.mxu0 0.0
    %204 = vmatprep.subr.mxu0 0.0
    %205 = vmatpush1.msra.mxu0 0.0
    %206 = vmatprep.subr.mxu0 0.0
    %207 = vmatpush1.msra.mxu0 0.0
    %208 = vmatprep.subr.mxu0 0.0
    %209 = vmatpush1.msra.mxu0 0.0
    %210 = vmatprep.subr.mxu0 0.0
    %211 = vmatpush1.msra.mxu0 0.0
    %212 = vmatprep.subr.mxu0 0.0
    %213 = vmatpush1.msra.mxu0 0.0
    %214 = vmatprep.subr.mxu0 0.0
    %215 = vmatpush1.msra.mxu0 0.0
    %216 = vmatprep.subr.mxu0 0.0
    %217 = vmatpush1.msra.mxu0 0.0
    %218 = vmatprep.subr.mxu0 0.0
    %219 = vmatpush1.msra.mxu0 0.0
    %220 = vmatprep.subr.mxu0 0.0
    %221 = vmatpush1.msra.mxu0 0.0
    %222 = vmatprep.subr.mxu0 0.0
    %223 = vmatpush1.msra.mxu0 0.0
    %224 = vmatprep.subr.mxu0 0.0
    %225 = vmatpush1.msra.mxu0 0.0
    %226 = vmatprep.subr.mxu0 0.0
    %227 = vmatpush1.msra.mxu0 0.0
    %228 = vmatprep.subr.mxu0 0.0
    %229 = vmatpush1.msra.mxu0 0.0
    %230 = vmatprep.mubr.f32.mxu0 0.0
    %231 = vmatmul.mubr.f32.gmra.mrb[0].mxu0 %v164
    %v232 = vpop.f32.mrb[0].mxu0
    %v233 = vadd.f32 %v160, %v232
    %v234 = vpop.f32.mrb[0].mxu0
    %235 = vdwg.mxu0
    %236 = vst [vmem:[#allocation8] sm:$0xff] %v233
    // Predicated region
    $region34: #{tpu_custom_call.1} parent=1 // pred_check
      _
    $region35: #{tpu_custom_call.1} parent=1 // pred_check_branch
      %238 = sbr.rel (0) target = $region37
    $region36: #{tpu_custom_call.1} parent=1 // pred_region
      %s240 = ssub.s32 128, 128
      %241 = vsyncadd [#allocation4], %s240
      %s243 = sshll.u32 [#allocation8], 4
      %s244 = int_to_ptr.vmem [resolvable:$true] %s243
      %246 = dma.vmem_to_hbm [thread:$0]  %s244, 128, %s5, [#allocation4]
    $region37: #{tpu_custom_call.1} parent=1 // pred_fallthru
      _
    // Predicated region
    $region38: #{tpu_custom_call.1} parent=1 // pred_check
      _
    $region39: #{tpu_custom_call.1} parent=1 // pred_check_branch
      %248 = sbr.rel (0) target = $region41
    $region40: #{tpu_custom_call.1} parent=1 // pred_region
      %249 = dma.done [#allocation4], 128
    $region41: #{tpu_custom_call.1} parent=1 // pred_fallthru
      _
    %250 = vsyncpa [#allocation3], 1
    %251 = vsyncpa [#allocation6], 1
    %252 = vsyncpa [#allocation4], 1

// kernel: tpu_custom_call.1
$region0: #{tpu_custom_call.1}
  #allocation0 [shape = 'u32[]', space=smem, size = 0x4, offset = 0x4, fixed_abs, tag = 'smem constant byte address 0x4 - core index']
  #allocation1 [shape = 'u32[144,128]{1,0:T(1,128)}', space=vmem, size = 0x12000, scoped, tag = 'internal scratch']
  %s0 = inlined_call_operand.hbm [shape: f32[8,32], index: 0, kind: input, shape index: {}]
  %s1 = inlined_call_operand.hbm [shape: f32[32,64], index: 1, kind: input, shape index: {}]
  %s2 = inlined_call_operand.vmem [shape: f32[1,64], index: 2, kind: input, shape index: {}]
  %s3 = inlined_call_operand.hbm [shape: f32[64,128], index: 3, kind: input, shape index: {}]
  %s4 = inlined_call_operand.vmem [shape: f32[1,128], index: 4, kind: input, shape index: {}]
  %s5 = inlined_call_operand.hbm [shape: f32[8,128], index: 5, kind: output, shape index: {}]
  %s6 = sld [smem:[#allocation0]]
  $region42: #{tpu_custom_call.1} parent=0
    _
  %s8 = ssub.s32 1, %s6
  %s9 = scalar_select 0, %s8, %s6
  $region1: #{tpu_custom_call.1} parent=0
    #allocation2 [shape = 'u8[4096]{0}', space=vmem, size = 0x1000, scoped, tag = 'input window, operand 0, single buffered']
    #allocation3 [shape = 's32[1]{0}', space=sflag, size = 0x4, scoped, tag = 'scoped memory for tpu_custom_call.1']
    #allocation4 [shape = 's32[1]{0}', space=sflag, size = 0x4, scoped, tag = 'scoped memory for tpu_custom_call.1']
    #allocation5 [shape = 'u8[16384]{0}', space=vmem, size = 0x4000, scoped, tag = 'input window, operand 1, single buffered']
    #allocation6 [shape = 's32[1]{0}', space=sflag, size = 0x4, scoped, tag = 'scoped memory for tpu_custom_call.1']
    #allocation7 [shape = 'u8[32768]{0}', space=vmem, size = 0x8000, scoped, tag = 'input window, operand 3, single buffered']
    #allocation8 [shape = 'u8[4096]{0}', space=vmem, size = 0x1000, scoped, tag = 'output window, operand 0, single buffered']
    %10 = vsyncpa [#allocation3], 0
    %11 = vsyncpa [#allocation6], 0
    %12 = vsyncpa [#allocation4], 0
    // Predicated region
    $region2: #{tpu_custom_call.1} parent=1 // pred_check
      _
    $region3: #{tpu_custom_call.1} parent=1 // pred_check_branch
      %14 = sbr.rel (0) target = $region5
    $region4: #{tpu_custom_call.1} parent=1 // pred_region
      %s16 = ssub.s32 128, 128
      %17 = vsyncadd [#allocation3], %s16
      %s19 = sshll.u32 [#allocation2], 4
      %s20 = int_to_ptr.vmem [resolvable:$true] %s19
      %22 = dma.hbm_to_vmem [thread:$0]  %s0, 128, %s20, [#allocation3]
    $region5: #{tpu_custom_call.1} parent=1 // pred_fallthru
      _
    // Predicated region
    $region6: #{tpu_custom_call.1} parent=1 // pred_check
      _
    $region7: #{tpu_custom_call.1} parent=1 // pred_check_branch
      %24 = sbr.rel (0) target = $region9
    $region8: #{tpu_custom_call.1} parent=1 // pred_region
      %s26 = ssub.s32 512, 512
      %27 = vsyncadd [#allocation6], %s26
      %s28 = sshll.u32 [#allocation5], 4
      %s29 = int_to_ptr.vmem [resolvable:$true] %s28
      %34 = dma.hbm_to_vmem [thread:$0]  %s1, 512, %s29, [#allocation6], 128, 128, 8
    $region9: #{tpu_custom_call.1} parent=1 // pred_fallthru
      _
    // Predicated region
    $region10: #{tpu_custom_call.1} parent=1 // pred_check
      _
    $region11: #{tpu_custom_call.1} parent=1 // pred_check_branch
      %36 = sbr.rel (0) target = $region13
    $region12: #{tpu_custom_call.1} parent=1 // pred_region
      _
    $region13: #{tpu_custom_call.1} parent=1 // pred_fallthru
      _
    // Predicated region
    $region14: #{tpu_custom_call.1} parent=1 // pred_check
      _
    $region15: #{tpu_custom_call.1} parent=1 // pred_check_branch
      %38 = sbr.rel (0) target = $region17
    $region16: #{tpu_custom_call.1} parent=1 // pred_region
      %s40 = ssub.s32 1024, 1024
      %41 = vsyncadd [#allocation6], %s40
      %s42 = sshll.u32 [#allocation7], 4
      %s43 = int_to_ptr.vmem [resolvable:$true] %s42
      %48 = dma.hbm_to_vmem [thread:$0]  %s3, 1024, %s43, [#allocation6], 128, 128, 8
    $region17: #{tpu_custom_call.1} parent=1 // pred_fallthru
      _
    // Predicated region
    $region18: #{tpu_custom_call.1} parent=1 // pred_check
      _
    $region19: #{tpu_custom_call.1} parent=1 // pred_check_branch
      %50 = sbr.rel (0) target = $region21
    $region20: #{tpu_custom_call.1} parent=1 // pred_region
      _
    $region21: #{tpu_custom_call.1} parent=1 // pred_fallthru
      _
    // Predicated region
    $region22: #{tpu_custom_call.1} parent=1 // pred_check
      _
    $region23: #{tpu_custom_call.1} parent=1 // pred_check_branch
      %52 = sbr.rel (0) target = $region25
    $region24: #{tpu_custom_call.1} parent=1 // pred_region
      %53 = dma.done [#allocation3], 128
    $region25: #{tpu_custom_call.1} parent=1 // pred_fallthru
      _
    // Predicated region
    $region26: #{tpu_custom_call.1} parent=1 // pred_check
      _
    $region27: #{tpu_custom_call.1} parent=1 // pred_check_branch
      %55 = sbr.rel (0) target = $region29
    $region28: #{tpu_custom_call.1} parent=1 // pred_region
      %56 = dma.done [#allocation6], 512
    $region29: #{tpu_custom_call.1} parent=1 // pred_fallthru
      _
    // Predicated region
    $region30: #{tpu_custom_call.1} parent=1 // pred_check
      _
    $region31: #{tpu_custom_call.1} parent=1 // pred_check_branch
      %58 = sbr.rel (0) target = $region33
    $region32: #{tpu_custom_call.1} parent=1 // pred_region
      %59 = dma.done [#allocation6], 1024
    $region33: #{tpu_custom_call.1} parent=1 // pred_fallthru
      _
    %v60 = vld [vmem:[#allocation2] sm:$0xff]
    %v61 = vld [vmem:[#allocation5] sm:$0xff]
    %v62 = vld [vmem:[#allocation5 + $0x8] sm:$0xff]
    %v63 = vld [vmem:[#allocation5 + $0x10] sm:$0xff]
    %v64 = vld [vmem:[#allocation5 + $0x18] sm:$0xff]
    %v65 = vld [vmem:[%s2] sm:$0x1]
    %v67 = vlaneseq
    %v68 = vshrl.u32 %v67, 7
    %v69 = vsub.s32 0, %v68
    %v70 = vrot.slane %v65, %v69
    %vm72 = vcmask 261120
    %v74 = vsel %vm72, %v60, 0
    %76 = vmatprep.subr.mxu0 0.0
    %77 = vmatpush1.msra.mxu0 %v61
    %78 = vmatprep.subr.mxu0 0.0
    %79 = vmatpush1.msra.mxu0 %v62
    %80 = vmatprep.subr.mxu0 0.0
    %81 = vmatpush1.msra.mxu0 %v63
    %82 = vmatprep.subr.mxu0 0.0
    %83 = vmatpush1.msra.mxu0 %v64
    %84 = vmatprep.subr.mxu0 0.0
    %85 = vmatpush1.msra.mxu0 0.0
    %86 = vmatprep.subr.mxu0 0.0
    %87 = vmatpush1.msra.mxu0 0.0
    %88 = vmatprep.subr.mxu0 0.0
    %89 = vmatpush1.msra.mxu0 0.0
    %90 = vmatprep.subr.mxu0 0.0
    %91 = vmatpush1.msra.mxu0 0.0
    %92 = vmatprep.subr.mxu0 0.0
    %93 = vmatpush1.msra.mxu0 0.0
    %94 = vmatprep.subr.mxu0 0.0
    %95 = vmatpush1.msra.mxu0 0.0
    %96 = vmatprep.subr.mxu0 0.0
    %97 = vmatpush1.msra.mxu0 0.0
    %98 = vmatprep.subr.mxu0 0.0
    %99 = vmatpush1.msra.mxu0 0.0
    %100 = vmatprep.subr.mxu0 0.0
    %101 = vmatpush1.msra.mxu0 0.0
    %102 = vmatprep.subr.mxu0 0.0
    %103 = vmatpush1.msra.mxu0 0.0
    %104 = vmatprep.subr.mxu0 0.0
    %105 = vmatpush1.msra.mxu0 0.0
    %106 = vmatprep.subr.mxu0 0.0
    %107 = vmatpush1.msra.mxu0 0.0
    %108 = vmatprep.subr.mxu0 0.0
    %109 = vmatpush1.msra.mxu0 0.0
    %110 = vmatprep.subr.mxu0 0.0
    %111 = vmatpush1.msra.mxu0 0.0
    %112 = vmatprep.subr.mxu0 0.0
    %113 = vmatpush1.msra.mxu0 0.0
    %114 = vmatprep.subr.mxu0 0.0
    %115 = vmatpush1.msra.mxu0 0.0
    %116 = vmatprep.subr.mxu0 0.0
    %117 = vmatpush1.msra.mxu0 0.0
    %118 = vmatprep.subr.mxu0 0.0
    %119 = vmatpush1.msra.mxu0 0.0
    %120 = vmatprep.subr.mxu0 0.0
    %121 = vmatpush1.msra.mxu0 0.0
    %122 = vmatprep.subr.mxu0 0.0
    %123 = vmatpush1.msra.mxu0 0.0
    %124 = vmatprep.subr.mxu0 0.0
    %125 = vmatpush1.msra.mxu0 0.0
    %126 = vmatprep.subr.mxu0 0.0
    %127 = vmatpush1.msra.mxu0 0.0
    %128 = vmatprep.subr.mxu0 0.0
    %129 = vmatpush1.msra.mxu0 0.0
    %130 = vmatprep.subr.mxu0 0.0
    %131 = vmatpush1.msra.mxu0 0.0
    %132 = vmatprep.subr.mxu0 0.0
    %133 = vmatpush1.msra.mxu0 0.0
    %134 = vmatprep.subr.mxu0 0.0
    %135 = vmatpush1.msra.mxu0 0.0
    %136 = vmatprep.subr.mxu0 0.0
    %137 = vmatpush1.msra.mxu0 0.0
    %138 = vmatprep.subr.mxu0 0.0
    %139 = vmatpush1.msra.mxu0 0.0
    %140 = vmatprep.mubr.f32.mxu0 0.0
    %141 = vmatmul.mubr.f32.gmra.mrb[0].mxu0 %v74
    %v142 = vpop.f32.mrb[0].mxu0
    %v143 = vadd.f32 %v70, %v142
    %v144 = vpop.f32.mrb[0].mxu0
    %145 = vdwg.mxu0
    %v146 = vmax.f32 %v143, 0.0
    %v147 = vld [vmem:[#allocation7] sm:$0xff]
    %v148 = vld [vmem:[#allocation7 + $0x8] sm:$0xff]
    %v149 = vld [vmem:[#allocation7 + $0x10] sm:$0xff]
    %v150 = vld [vmem:[#allocation7 + $0x18] sm:$0xff]
    %v151 = vld [vmem:[#allocation7 + $0x20] sm:$0xff]
    %v152 = vld [vmem:[#allocation7 + $0x28] sm:$0xff]
    %v153 = vld [vmem:[#allocation7 + $0x30] sm:$0xff]
    %v154 = vld [vmem:[#allocation7 + $0x38] sm:$0xff]
    %v155 = vld [vmem:[%s4] sm:$0x1]
    %v157 = vlaneseq
    %v158 = vshrl.u32 %v157, 7
    %v159 = vsub.s32 0, %v158
    %v160 = vrot.slane %v155, %v159
    %vm162 = vcmask 523264
    %v164 = vsel %vm162, %v146, 0
    %166 = vmatprep.subr.mxu0 0.0
    %167 = vmatpush1.msra.mxu0 %v147
    %168 = vmatprep.subr.mxu0 0.0
    %169 = vmatpush1.msra.mxu0 %v148
    %170 = vmatprep.subr.mxu0 0.0
    %171 = vmatpush1.msra.mxu0 %v149
    %172 = vmatprep.subr.mxu0 0.0
    %173 = vmatpush1.msra.mxu0 %v150
    %174 = vmatprep.subr.mxu0 0.0
    %175 = vmatpush1.msra.mxu0 %v151
    %176 = vmatprep.subr.mxu0 0.0
    %177 = vmatpush1.msra.mxu0 %v152
    %178 = vmatprep.subr.mxu0 0.0
    %179 = vmatpush1.msra.mxu0 %v153
    %180 = vmatprep.subr.mxu0 0.0
    %181 = vmatpush1.msra.mxu0 %v154
    %182 = vmatprep.subr.mxu0 0.0
    %183 = vmatpush1.msra.mxu0 0.0
    %184 = vmatprep.subr.mxu0 0.0
    %185 = vmatpush1.msra.mxu0 0.0
    %186 = vmatprep.subr.mxu0 0.0
    %187 = vmatpush1.msra.mxu0 0.0
    %188 = vmatprep.subr.mxu0 0.0
    %189 = vmatpush1.msra.mxu0 0.0
    %190 = vmatprep.subr.mxu0 0.0
    %191 = vmatpush1.msra.mxu0 0.0
    %192 = vmatprep.subr.mxu0 0.0
    %193 = vmatpush1.msra.mxu0 0.0
    %194 = vmatprep.subr.mxu0 0.0
    %195 = vmatpush1.msra.mxu0 0.0
    %196 = vmatprep.subr.mxu0 0.0
    %197 = vmatpush1.msra.mxu0 0.0
    %198 = vmatprep.subr.mxu0 0.0
    %199 = vmatpush1.msra.mxu0 0.0
    %200 = vmatprep.subr.mxu0 0.0
    %201 = vmatpush1.msra.mxu0 0.0
    %202 = vmatprep.subr.mxu0 0.0
    %203 = vmatpush1.msra.mxu0 0.0
    %204 = vmatprep.subr.mxu0 0.0
    %205 = vmatpush1.msra.mxu0 0.0
    %206 = vmatprep.subr.mxu0 0.0
    %207 = vmatpush1.msra.mxu0 0.0
    %208 = vmatprep.subr.mxu0 0.0
    %209 = vmatpush1.msra.mxu0 0.0
    %210 = vmatprep.subr.mxu0 0.0
    %211 = vmatpush1.msra.mxu0 0.0
    %212 = vmatprep.subr.mxu0 0.0
    %213 = vmatpush1.msra.mxu0 0.0
    %214 = vmatprep.subr.mxu0 0.0
    %215 = vmatpush1.msra.mxu0 0.0
    %216 = vmatprep.subr.mxu0 0.0
    %217 = vmatpush1.msra.mxu0 0.0
    %218 = vmatprep.subr.mxu0 0.0
    %219 = vmatpush1.msra.mxu0 0.0
    %220 = vmatprep.subr.mxu0 0.0
    %221 = vmatpush1.msra.mxu0 0.0
    %222 = vmatprep.subr.mxu0 0.0
    %223 = vmatpush1.msra.mxu0 0.0
    %224 = vmatprep.subr.mxu0 0.0
    %225 = vmatpush1.msra.mxu0 0.0
    %226 = vmatprep.subr.mxu0 0.0
    %227 = vmatpush1.msra.mxu0 0.0
    %228 = vmatprep.subr.mxu0 0.0
    %229 = vmatpush1.msra.mxu0 0.0
    %230 = vmatprep.mubr.f32.mxu0 0.0
    %231 = vmatmul.mubr.f32.gmra.mrb[0].mxu0 %v164
    %v232 = vpop.f32.mrb[0].mxu0
    %v233 = vadd.f32 %v160, %v232
    %v234 = vpop.f32.mrb[0].mxu0
    %235 = vdwg.mxu0
    %236 = vst [vmem:[#allocation8] sm:$0xff] %v233
    // Predicated region
    $region34: #{tpu_custom_call.1} parent=1 // pred_check
      _
    $region35: #{tpu_custom_call.1} parent=1 // pred_check_branch
      %238 = sbr.rel (0) target = $region37
    $region36: #{tpu_custom_call.1} parent=1 // pred_region
      %s240 = ssub.s32 128, 128
      %241 = vsyncadd [#allocation4], %s240
      %s243 = sshll.u32 [#allocation8], 4
      %s244 = int_to_ptr.vmem [resolvable:$true] %s243
      %246 = dma.vmem_to_hbm [thread:$0]  %s244, 128, %s5, [#allocation4]
    $region37: #{tpu_custom_call.1} parent=1 // pred_fallthru
      _
    // Predicated region
    $region38: #{tpu_custom_call.1} parent=1 // pred_check
      _
    $region39: #{tpu_custom_call.1} parent=1 // pred_check_branch
      %248 = sbr.rel (0) target = $region41
    $region40: #{tpu_custom_call.1} parent=1 // pred_region
      %249 = dma.done [#allocation4], 128
    $region41: #{tpu_custom_call.1} parent=1 // pred_fallthru
      _
    %250 = vsyncpa [#allocation3], 1
    %251 = vsyncpa [#allocation6], 1
    %252 = vsyncpa [#allocation4], 1

</llo_original>
